<compile_context>
chip_gen: v6e
topology: v6e:2x2x1
jax: 0.10.0
libtpu: 0.0.40
codegen_flags: <defaults>
</compile_context>

<pallas_src>
import jax
import jax.numpy as jnp
from jax.experimental import pallas as pl
from jax.experimental.pallas import tpu as pltpu


def _pick_tile(dim, max_tile, align):
    """Largest t <= min(dim, max_tile) with dim % t == 0 and (t % align == 0 or t == dim).

    Falls back to the full dimension (always a legal block shape).
    TODO(synk): vocab sizes with no 128-aligned divisor (e.g. GPT-2's 50257)
    should be padded to a multiple of 128 with masked stores instead.
    """
    t = min(dim, max_tile)
    while t > 0:
        if dim % t == 0 and (t % align == 0 or t == dim):
            return t
        t -= 1
    return dim


def _gpt_head_kernel(x_ref, pos_ref, w_ref, out_ref):
    # x_ref:   (tm, E)  token-embedding rows for this M tile (f32, VMEM-resident
    #                   across the whole V sweep — block index ignores j)
    # pos_ref: (tm, E)  matching positional-embedding rows (f32)
    # w_ref:   (E, tn)  out_head weight tile (bf16, streamed from HBM)
    # out_ref: (tm, tn) logits tile (f32)
    x = x_ref[...] + pos_ref[...]                     # f32 broadcast add (VPU)
    # dropout (eval mode) / DummyTransformerBlock / DummyLayerNorm are identities.
    out_ref[...] = jnp.dot(
        x.astype(w_ref.dtype), w_ref[...],            # bf16 x bf16 -> MXU
        preferred_element_type=jnp.float32,           # f32 accumulation
    ).astype(out_ref.dtype)


def dummy_gpt_forward(in_idx, tok_emb_table, pos_emb_table, out_head_w,
                      *, weight_dtype=jnp.bfloat16, max_tm=256, max_tn=2048):
    """in_idx: (B, T) int32 token ids. Returns logits (B, T, V) float32.

    out_head_w is stored as (E, V) (transpose of PyTorch nn.Linear's (V, E)).
    """
    B, T = in_idx.shape
    vocab, E = tok_emb_table.shape
    E_w, V = out_head_w.shape
    assert E_w == E

    M = B * T

    # --- glue: embedding gathers (nn.Embedding lookups), flattened to rows ----
    # TODO(synk): fuse this gather into the kernel (scalar-prefetched token ids +
    # per-row DMA from the HBM embedding table) to drop one (M, E) HBM round trip.
    x_tok = jnp.take(tok_emb_table, in_idx.reshape(-1), axis=0)    # (M, E) f32
    pos = pos_emb_table[:T]                                        # (T, E) f32

    # Streamed weight in bf16; f32 accumulation happens in-kernel.
    w = out_head_w.astype(weight_dtype)                            # (E, V)

    # --- tile selection -------------------------------------------------------
    # tm: rows per M tile.  Must divide T so one tile maps to contiguous
    #     positions of a single sequence (lets pos use a plain BlockSpec with an
    #     `i % (T // tm)` index map).  256 matches the v6e/v7x MXU native size
    #     (128 is also fine for v5e); toy shapes just use the full dim.
    # tn: vocab cols per tile.  128-lane aligned and capped at 2048 so the
    #     double-buffered (E, tn) weight tile stays well inside v7x's 64 MiB VMEM
    #     (v6e/v5e could go larger).
    tm = _pick_tile(T, max_tm, 8)
    tn = _pick_tile(V, max_tn, 128)
    n_pos_blocks = T // tm

    grid = (M // tm, V // tn)   # V innermost -> lhs tile resident across V sweep

    cost = pl.CostEstimate(
        flops=2 * M * E * V,
        transcendentals=0,
        bytes_accessed=(x_tok.size * x_tok.dtype.itemsize
                        + pos.size * pos.dtype.itemsize
                        + w.size * w.dtype.itemsize
                        + M * V * 4),
    )

    logits = pl.pallas_call(
        _gpt_head_kernel,
        out_shape=jax.ShapeDtypeStruct((M, V), jnp.float32),
        grid_spec=pltpu.PrefetchScalarGridSpec(
            num_scalar_prefetch=0,
            grid=grid,
            in_specs=[
                # Activation rows: block index independent of j -> stays resident.
                pl.BlockSpec((tm, E), lambda i, j: (i, 0)),
                # Positional rows for this M tile (tiny, re-fetched per M tile).
                pl.BlockSpec((tm, E), lambda i, j: (i % n_pos_blocks, 0)),
                # Weight tile: streamed across the V sweep.
                pl.BlockSpec((E, tn), lambda i, j: (0, j)),
            ],
            out_specs=pl.BlockSpec((tm, tn), lambda i, j: (i, j)),
        ),
        compiler_params=pltpu.CompilerParams(
            dimension_semantics=("parallel", "parallel"),
            vmem_limit_bytes=48 * 1024 * 1024,
        ),
        cost_estimate=cost,
    )(x_tok, pos, w)

    return logits.reshape(B, T, V)


if __name__ == "__main__":
    # Small GPT-2-style config consistent with the module's __init__.
    config = {
        "vocab_size": 256,
        "context_length": 16,
        "n_embd": 64,
        "n_layers": 2,       # DummyTransformerBlocks are identities
        "dropout": 0.1,      # applied in eval mode -> identity
    }
    # TODO(synk): dropout is treated as eval-mode identity (no RNG mask / 1/(1-p) scale).

    B, T = 2, 8
    V, E, C = config["vocab_size"], config["n_embd"], config["context_length"]

    key = jax.random.PRNGKey(0)
    k_tok, k_pos, k_w, k_idx = jax.random.split(key, 4)

    # Deterministic parameter init (shapes from nn.Embedding / nn.Linear).
    tok_emb_table = jax.random.normal(k_tok, (V, E), dtype=jnp.float32) * 0.02
    pos_emb_table = jax.random.normal(k_pos, (C, E), dtype=jnp.float32) * 0.02
    # PyTorch nn.Linear(E, V, bias=False) stores weight as (V, E); we keep (E, V).
    out_head_w = jax.random.normal(k_w, (E, V), dtype=jnp.float32) * 0.02

    in_idx = jax.random.randint(k_idx, (B, T), 0, V, dtype=jnp.int32)

    logits = dummy_gpt_forward(in_idx, tok_emb_table, pos_emb_table, out_head_w)
    logits = jax.block_until_ready(logits)

    # Pure-JAX reference with the same numerics as the kernel
    # (f32 gather + pos add, bf16 operands into an f32-accumulating matmul).
    x = (jnp.take(tok_emb_table, in_idx, axis=0) + pos_emb_table[:T]).reshape(B * T, E)
    ref = jnp.dot(
        x.astype(jnp.bfloat16), out_head_w.astype(jnp.bfloat16),
        preferred_element_type=jnp.float32,
    ).reshape(B, T, V)

    assert logits.shape == (B, T, V)
    assert jnp.allclose(logits, ref, atol=1e-4, rtol=1e-4), \
        float(jnp.max(jnp.abs(logits - ref)))

    print("KERNEL_OK")
</pallas_src>

<mosaic_0001>
module attributes {stable_mosaic.version = 11 : i64} {
  func.func @_gpt_head_kernel(%arg0: i32, %arg1: i32, %arg2: memref<8x64xf32, #tpu.memory_space<vmem>>, %arg3: memref<8x64xf32, #tpu.memory_space<vmem>>, %arg4: memref<64x256xbf16, #tpu.memory_space<vmem>>, %arg5: memref<8x256xf32, #tpu.memory_space<vmem>>) attributes {dimension_semantics = [#tpu.dimension_semantics<parallel>, #tpu.dimension_semantics<parallel>], iteration_bounds = array<i64: 2, 1>, scalar_prefetch = 0 : i64, scratch_operands = 0 : i64, tpu.core_type = #tpu.core_type<tc>, window_params = [{transform_indices = @transform_0, window_bounds = array<i64: 8, 64>}, {transform_indices = @transform_1, window_bounds = array<i64: 8, 64>}, {transform_indices = @transform_2, window_bounds = array<i64: 64, 256>}, {transform_indices = @transform_3, window_bounds = array<i64: 8, 256>}]} {
    %c0 = arith.constant 0 : index
    %c0_0 = arith.constant 0 : index
    %0 = vector.load %arg2[%c0, %c0_0] : memref<8x64xf32, #tpu.memory_space<vmem>>, vector<8x64xf32>
    %c0_1 = arith.constant 0 : index
    %c0_2 = arith.constant 0 : index
    %1 = vector.load %arg3[%c0_1, %c0_2] : memref<8x64xf32, #tpu.memory_space<vmem>>, vector<8x64xf32>
    %2 = arith.addf %0, %1 : vector<8x64xf32>
    %3 = arith.truncf %2 : vector<8x64xf32> to vector<8x64xbf16>
    %c0_3 = arith.constant 0 : index
    %c0_4 = arith.constant 0 : index
    %4 = vector.load %arg4[%c0_3, %c0_4] : memref<64x256xbf16, #tpu.memory_space<vmem>>, vector<64x256xbf16>
    %cst = arith.constant dense<0.000000e+00> : vector<8x256xf32>
    %5 = tpu.matmul %3, %4, %cst {dimension_numbers = #tpu.dot_dimension_numbers<[1], [0], [0], [1], [0, 0, 1, 1], [], []>} : vector<8x64xbf16>, vector<64x256xbf16>, vector<8x256xf32> -> vector<8x256xf32>
    %c0_5 = arith.constant 0 : index
    %c0_6 = arith.constant 0 : index
    %6 = vector.load %arg5[%c0_5, %c0_6] : memref<8x256xf32, #tpu.memory_space<vmem>>, vector<8x256xf32>
    tpu.vector_store %arg5[%c0_5, %c0_6], %5 {strides = array<i32>} : memref<8x256xf32, #tpu.memory_space<vmem>>, vector<8x256xf32>,
    return
  }
  func.func @transform_0(%arg0: i32, %arg1: i32) -> (i32, i32) {
    %c0_i32 = arith.constant 0 : i32
    %c0_i32_0 = arith.constant 0 : i32
    return %arg0, %c0_i32 : i32, i32
  }
  func.func @transform_1(%arg0: i32, %arg1: i32) -> (i32, i32) {
    %c1_i32 = arith.constant 1 : i32
    %c0_i32 = arith.constant 0 : i32
    %0 = arith.cmpi eq, %c1_i32, %c0_i32 : i32
    %c1_i32_0 = arith.constant 1 : i32
    %1 = arith.select %0, %c1_i32_0, %c1_i32 : i32
    %2 = arith.remsi %arg0, %1 : i32
    %c0_i32_1 = arith.constant 0 : i32
    %3 = arith.cmpi ne, %2, %c0_i32_1 : i32
    %c0_i32_2 = arith.constant 0 : i32
    %4 = arith.cmpi slt, %2, %c0_i32_2 : i32
    %c0_i32_3 = arith.constant 0 : i32
    %5 = arith.cmpi slt, %1, %c0_i32_3 : i32
    %6 = arith.xori %4, %5 : i1
    %7 = arith.andi %6, %3 : i1
    %8 = arith.addi %2, %1 : i32
    %9 = arith.select %7, %8, %2 : i32
    %c0_i32_4 = arith.constant 0 : i32
    %c0_i32_5 = arith.constant 0 : i32
    return %9, %c0_i32_4 : i32, i32
  }
  func.func @transform_2(%arg0: i32, %arg1: i32) -> (i32, i32) {
    %c0_i32 = arith.constant 0 : i32
    %c0_i32_0 = arith.constant 0 : i32
    return %c0_i32, %arg1 : i32, i32
  }
  func.func @transform_3(%arg0: i32, %arg1: i32) -> (i32, i32) {
    %c0_i32 = arith.constant 0 : i32
    return %arg0, %arg1 : i32, i32
  }
}

</mosaic_0001>

<llo_original>
// kernel: tpu_custom_call.1
$region0: #{tpu_custom_call.1}
  #allocation0 [shape = 'u32[]', space=smem, size = 0x4, offset = 0x4, fixed_abs, tag = 'smem constant byte address 0x4 - core index']
  #allocation1 [shape = 'u32[144,128]{1,0:T(1,128)}', space=vmem, size = 0x12000, scoped, tag = 'internal scratch']
  %s0 = inlined_call_operand.hbm [shape: f32[16,64], index: 0, kind: input, shape index: {}]
  %s1 = inlined_call_operand.hbm [shape: f32[8,64], index: 1, kind: input, shape index: {}]
  %s2 = inlined_call_operand.hbm [shape: bf16[64,256], index: 2, kind: input, shape index: {}]
  %s3 = inlined_call_operand.hbm [shape: f32[16,256], index: 3, kind: output, shape index: {}]
  %s4 = sld [smem:[#allocation0]]
  $region57: #{tpu_custom_call.1} parent=0
    _
  %s6 = ssub.s32 1, %s4
  %s7 = scalar_select 0, %s6, %s4
  $region1: #{tpu_custom_call.1} parent=0
    #allocation2 [shape = 'u8[8192]{0}', space=vmem, size = 0x2000, scoped, tag = 'input window, operand 0']
    #allocation3 [shape = 's32[2]{0}', space=sflag, size = 0x8, scoped, tag = 'scoped memory for tpu_custom_call.1']
    #allocation4 [shape = 's32[2]{0}', space=sflag, size = 0x8, scoped, tag = 'scoped memory for tpu_custom_call.1']
    #allocation5 [shape = 'u8[4096]{0}', space=vmem, size = 0x1000, scoped, tag = 'input window, operand 1, single buffered']
    #allocation6 [shape = 's32[1]{0}', space=sflag, size = 0x4, scoped, tag = 'scoped memory for tpu_custom_call.1']
    #allocation7 [shape = 'u8[32768]{0}', space=vmem, size = 0x8000, scoped, tag = 'input window, operand 2, single buffered']
    #allocation8 [shape = 'u8[16384]{0}', space=vmem, size = 0x4000, scoped, tag = 'output window, operand 0']
    %8 = vsyncpa [#allocation3], 0
    %s9 = scalar_lea.sflag [#allocation3], 1
    %10 = vsyncpa %s9, 0
    %11 = vsyncpa [#allocation6], 0
    %12 = vsyncpa [#allocation4], 0
    %s13 = scalar_lea.sflag [#allocation4], 1
    %14 = vsyncpa %s13, 0
    loop: start=0, step=1, limit=4
    $region2: #{tpu_custom_call.1} parent=1 // loop_pre_header
      _
    $region3: #{tpu_custom_call.1} parent=1 // loop_header
      %s16 = sphi 0, %s20
      %p17 = scmp.ge.s32.totalorder %s16, 4
      %s23 = sphi 0, %s35
      %s24 = sphi 0, %s31
      %s25 = sphi 0, %s23
      %s26 = sphi 0, %s24
      %s27 = sphi 0, %s25
      %s28 = sphi 0, %s26
      %s38 = sphi 0, %s40
      %s41 = sphi 0, %s38
      %s42 = sphi 0, %s41
      %s58 = sphi 0, %s42
      %s62 = sphi 0, %s62
      %s64 = sphi 0, %s62
      %s65 = sphi 0, %s64
      %s79 = sphi 0, %s65
      %s85 = sphi 0, %s87
      %s88 = sphi 0, %s85
      %s89 = sphi 0, %s88
      %s105 = sphi 0, %s89
      %s113 = sphi 0, %s115
      %s116 = sphi 0, %s113
      %s117 = sphi 0, %s116
      %s133 = sphi 0, %s117
    $region4: #{tpu_custom_call.1} parent=1 // loop_header_branch
      %19 = sbr.rel (%p17) target = $region8
    $region5: #{tpu_custom_call.1} parent=1 // loop_body
      %s21 = ssub.s32 %s16, 1
      %s22 = ssub.s32 %s16, 2
      %s29 = sadd.s32 1, %s24
      %p30 = scmp.ge.s32.totalorder %s29, 1
      %s31 = scalar_select %p30, 0, %s29
      %s32 = sadd.s32 1, %s23
      %s33 = scalar_select %p30, %s32, %s23
      %p34 = scmp.ge.s32.totalorder %s33, 2
      %s35 = scalar_select %p34, 0, %s33
      %s36 = ssub.s32 %s23, %s35
      %p37 = scmp.eq.s32.totalorder %s36, 0
      %s39 = sadd.s32 %s38, 1
      %s40 = scalar_select %p37, %s38, %s39
      %p43 = pneg %p37
      %p44 = scmp.eq.s32.totalorder %s16, 1
      %p45 = por %p43, %p44
      %p46 = scmp.ne.s32.totalorder %s38, %s41
      %p47 = scmp.eq.s32.totalorder %s16, 0
      %p48 = por %p46, %p47
      %p49 = scmp.ne.s32.totalorder %s38, %s41
      %p50 = scmp.eq.s32.totalorder %s21, 1
      %p51 = por %p49, %p50
      %p52 = scmp.ne.s32.totalorder %s41, %s42
      %p53 = scmp.eq.s32.totalorder %s21, 0
      %p54 = por %p52, %p53
      %p55 = scmp.ne.s32.totalorder %s41, %s42
      %p56 = scmp.eq.s32.totalorder %s22, 1
      %p57 = por %p55, %p56
      %p59 = scmp.ne.s32.totalorder %s42, %s58
      %p60 = scmp.eq.s32.totalorder %s22, 0
      %p61 = por %p59, %p60
      %s63 = sadd.s32 %s62, 1
      %p66 = scmp.eq.s32.totalorder %s16, 1
      %p67 = scmp.ne.s32.totalorder %s62, %s64
      %p68 = scmp.eq.s32.totalorder %s16, 0
      %p69 = por %p67, %p68
      %p70 = scmp.ne.s32.totalorder %s62, %s64
      %p71 = scmp.eq.s32.totalorder %s21, 1
      %p72 = por %p70, %p71
      %p73 = scmp.ne.s32.totalorder %s64, %s65
      %p74 = scmp.eq.s32.totalorder %s21, 0
      %p75 = por %p73, %p74
      %p76 = scmp.ne.s32.totalorder %s64, %s65
      %p77 = scmp.eq.s32.totalorder %s22, 1
      %p78 = por %p76, %p77
      %p80 = scmp.ne.s32.totalorder %s65, %s79
      %p81 = scmp.eq.s32.totalorder %s22, 0
      %p82 = por %p80, %p81
      %s83 = ssub.s32 %s24, %s31
      %p84 = scmp.eq.s32.totalorder %s83, 0
      %s86 = sadd.s32 %s85, 1
      %s87 = scalar_select %p84, %s85, %s86
      %p90 = pneg %p84
      %p91 = scmp.eq.s32.totalorder %s16, 1
      %p92 = por %p90, %p91
      %p93 = scmp.ne.s32.totalorder %s85, %s88
      %p94 = scmp.eq.s32.totalorder %s16, 0
      %p95 = por %p93, %p94
      %p96 = scmp.ne.s32.totalorder %s85, %s88
      %p97 = scmp.eq.s32.totalorder %s21, 1
      %p98 = por %p96, %p97
      %p99 = scmp.ne.s32.totalorder %s88, %s89
      %p100 = scmp.eq.s32.totalorder %s21, 0
      %p101 = por %p99, %p100
      %p102 = scmp.ne.s32.totalorder %s88, %s89
      %p103 = scmp.eq.s32.totalorder %s22, 1
      %p104 = por %p102, %p103
      %p106 = scmp.ne.s32.totalorder %s89, %s105
      %p107 = scmp.eq.s32.totalorder %s22, 0
      %p108 = por %p106, %p107
      %s109 = ssub.s32 %s23, %s35
      %s110 = ssub.s32 %s24, %s31
      %s111 = sor.u32 %s109, %s110
      %p112 = scmp.eq.s32.totalorder %s111, 0
      %s114 = sadd.s32 %s113, 1
      %s115 = scalar_select %p112, %s113, %s114
      %p118 = pneg %p112
      %p119 = scmp.eq.s32.totalorder %s16, 1
      %p120 = por %p118, %p119
      %p121 = scmp.ne.s32.totalorder %s113, %s116
      %p122 = scmp.eq.s32.totalorder %s16, 0
      %p123 = por %p121, %p122
      %p124 = scmp.ne.s32.totalorder %s113, %s116
      %p125 = scmp.eq.s32.totalorder %s21, 1
      %p126 = por %p124, %p125
      %p127 = scmp.ne.s32.totalorder %s116, %s117
      %p128 = scmp.eq.s32.totalorder %s21, 0
      %p129 = por %p127, %p128
      %p130 = scmp.ne.s32.totalorder %s116, %s117
      %p131 = scmp.eq.s32.totalorder %s22, 1
      %p132 = por %p130, %p131
      %p134 = scmp.ne.s32.totalorder %s117, %s133
      %p135 = scmp.eq.s32.totalorder %s22, 0
      %p136 = por %p134, %p135
      %p137 = scmp.le.s32.totalorder 1, %s16
      %p138 = scmp.lt.s32.totalorder %s16, 3
      %p139 = pnand %p137, %p138
      %p140 = pneg %p139
      // Predicated region
      $region9: #{tpu_custom_call.1} parent=5 // pred_check
        _
      $region10: #{tpu_custom_call.1} parent=5 // pred_check_branch
        %142 = sbr.rel (%p139) target = $region12
      $region11: #{tpu_custom_call.1} parent=5 // pred_region
        %s143 = ssub.s32 %s16, 1
        // Predicated region
        $region13: #{tpu_custom_call.1} parent=11 // pred_check
          %p144 = pneg %p75
        $region14: #{tpu_custom_call.1} parent=11 // pred_check_branch
          %146 = sbr.rel (%p144) target = $region16
        $region15: #{tpu_custom_call.1} parent=11 // pred_region
          %s148 = ssub.s32 128, 128
          %149 = vsyncadd [#allocation6], %s148
          %s151 = sshll.u32 [#allocation5], 4
          %s152 = int_to_ptr.vmem [resolvable:$true] %s151
          %154 = dma.hbm_to_vmem [thread:$0]  %s1, 128, %s152, [#allocation6]
        $region16: #{tpu_custom_call.1} parent=11 // pred_fallthru
          _
        // Predicated region
        $region17: #{tpu_custom_call.1} parent=11 // pred_check
          %p155 = pneg %p101
        $region18: #{tpu_custom_call.1} parent=11 // pred_check_branch
          %157 = sbr.rel (%p155) target = $region20
        $region19: #{tpu_custom_call.1} parent=11 // pred_region
          %s158 = smul.u32 2, %s26
          %s160 = ssub.s32 1024, 1024
          %161 = vsyncadd [#allocation6], %s160
          %s162 = smul.addr %s158, 64
          %s163 = scalar_lea.hbm %s2, %s162
          %s164 = sshll.u32 [#allocation7], 4
          %s165 = int_to_ptr.vmem [resolvable:$true] %s164
          %170 = dma.hbm_to_vmem [thread:$0]  %s163, 1024, %s165, [#allocation6], 128, 128, 8
        $region20: #{tpu_custom_call.1} parent=11 // pred_fallthru
          _
      $region12: #{tpu_custom_call.1} parent=5 // pred_fallthru
        _
      %p171 = scmp.lt.s32.totalorder %s16, 2
      // Predicated region
      $region21: #{tpu_custom_call.1} parent=5 // pred_check
        %p172 = pneg %p171
      $region22: #{tpu_custom_call.1} parent=5 // pred_check_branch
        %174 = sbr.rel (%p172) target = $region24
      $region23: #{tpu_custom_call.1} parent=5 // pred_region
        // Predicated region
        $region25: #{tpu_custom_call.1} parent=23 // pred_check
          %p175 = pneg %p48
        $region26: #{tpu_custom_call.1} parent=23 // pred_check_branch
          %177 = sbr.rel (%p175) target = $region28
        $region27: #{tpu_custom_call.1} parent=23 // pred_region
          %s178 = sand.u32 %s38, 1
          %s179 = scalar_lea.sflag [#allocation3], %s178
          %s180 = sand.u32 %s38, 1
          %s181 = smul.addr %s180, 8
          %s182 = scalar_lea.vmem [#allocation2], %s181
          %s184 = ssub.s32 128, 128
          %185 = vsyncadd %s179, %s184
          %s186 = smul.addr %s23, 128
          %s187 = scalar_lea.hbm %s0, %s186
          %s189 = sshll.u32 %s182, 4
          %s190 = int_to_ptr.vmem [resolvable:$true] %s189
          %192 = dma.hbm_to_vmem [thread:$0]  %s187, 128, %s190, %s179
        $region28: #{tpu_custom_call.1} parent=23 // pred_fallthru
          _
      $region24: #{tpu_custom_call.1} parent=5 // pred_fallthru
        _
      %p193 = scmp.le.s32.totalorder 1, %s16
      %p194 = scmp.lt.s32.totalorder %s16, 3
      %p195 = pnand %p193, %p194
      %p196 = pneg %p195
      // Predicated region
      $region29: #{tpu_custom_call.1} parent=5 // pred_check
        _
      $region30: #{tpu_custom_call.1} parent=5 // pred_check_branch
        %198 = sbr.rel (%p195) target = $region32
      $region31: #{tpu_custom_call.1} parent=5 // pred_region
        %s199 = ssub.s32 %s16, 1
        %s200 = sand.u32 %s41, 1
        %s201 = scalar_lea.sflag [#allocation3], %s200
        %s202 = sand.u32 %s41, 1
        %s203 = smul.addr %s202, 8
        %s204 = scalar_lea.vmem [#allocation2], %s203
        // Predicated region
        $region33: #{tpu_custom_call.1} parent=31 // pred_check
          %p205 = pneg %p54
        $region34: #{tpu_custom_call.1} parent=31 // pred_check_branch
          %207 = sbr.rel (%p205) target = $region36
        $region35: #{tpu_custom_call.1} parent=31 // pred_region
          %208 = dma.done %s201, 128
        $region36: #{tpu_custom_call.1} parent=31 // pred_fallthru
          _
        // Predicated region
        $region37: #{tpu_custom_call.1} parent=31 // pred_check
          %p209 = pneg %p75
        $region38: #{tpu_custom_call.1} parent=31 // pred_check_branch
          %211 = sbr.rel (%p209) target = $region40
        $region39: #{tpu_custom_call.1} parent=31 // pred_region
          %212 = dma.done [#allocation6], 128
        $region40: #{tpu_custom_call.1} parent=31 // pred_fallthru
          _
        // Predicated region
        $region41: #{tpu_custom_call.1} parent=31 // pred_check
          %p213 = pneg %p101
        $region42: #{tpu_custom_call.1} parent=31 // pred_check_branch
          %215 = sbr.rel (%p213) target = $region44
        $region43: #{tpu_custom_call.1} parent=31 // pred_region
          %216 = dma.done [#allocation6], 1024
        $region44: #{tpu_custom_call.1} parent=31 // pred_fallthru
          _
        %s217 = sand.u32 %s41, 1
        %s218 = scalar_lea.sflag [#allocation3], %s217
        %s219 = sand.u32 %s41, 1
        %s220 = smul.addr %s219, 8
        %s221 = scalar_lea.vmem [#allocation2], %s220
        %p222 = pneg %p54
        %p223 = pneg %p51
        %p224 = pneg %p75
        %p225 = pneg %p72
        %p226 = pneg %p101
        %p227 = pneg %p98
        %p228 = pneg %p129
        %p229 = pneg %p126
        %s230 = sand.u32 %s116, 1
        %s231 = scalar_lea.sflag [#allocation4], %s230
        %s232 = sand.u32 %s116, 1
        %s233 = smul.addr %s232, 16
        %s234 = scalar_lea.vmem [#allocation8], %s233
        %s235 = smul.u32 2, %s26
        %s236 = smul.u32 2, %s26
        %v238 = vld [vmem:[%s204] sm:$0xff]
        %v239 = vld [vmem:[#allocation5] sm:$0xff]
        %v240 = vadd.f32 %v238, %v239
        %v241 = vpack.c.bf16 %v240, %v240
        %v242 = vld [vmem:[#allocation7] sm:$0xff]
        %v243 = vld [vmem:[#allocation7 + $0x8] sm:$0xff]
        %v244 = vld [vmem:[#allocation7 + $0x10] sm:$0xff]
        %v245 = vld [vmem:[#allocation7 + $0x18] sm:$0xff]
        %v246 = vld [vmem:[#allocation7 + $0x20] sm:$0xff]
        %v247 = vld [vmem:[#allocation7 + $0x28] sm:$0xff]
        %v248 = vld [vmem:[#allocation7 + $0x30] sm:$0xff]
        %v249 = vld [vmem:[#allocation7 + $0x38] sm:$0xff]
        %v258 = vunpack.c.l.b16 %v242
        %v259 = vunpack.c.h.b16 %v242
        %v260 = vunpack.c.l.b16 %v243
        %v261 = vunpack.c.h.b16 %v243
        %v262 = vunpack.c.l.b16 %v244
        %v263 = vunpack.c.h.b16 %v244
        %v264 = vunpack.c.l.b16 %v245
        %v265 = vunpack.c.h.b16 %v245
        %v266 = vunpack.c.l.b16 %v246
        %v267 = vunpack.c.h.b16 %v246
        %v268 = vunpack.c.l.b16 %v247
        %v269 = vunpack.c.h.b16 %v247
        %v270 = vunpack.c.l.b16 %v248
        %v271 = vunpack.c.h.b16 %v248
        %v272 = vunpack.c.l.b16 %v249
        %v273 = vunpack.c.h.b16 %v249
        %v274 = vpack.c.b16 %v260, %v258
        %v275 = vpack.c.b16 %v261, %v259
        %v276 = vpack.c.b16 %v264, %v262
        %v277 = vpack.c.b16 %v265, %v263
        %v278 = vpack.c.b16 %v268, %v266
        %v279 = vpack.c.b16 %v269, %v267
        %v280 = vpack.c.b16 %v272, %v270
        %v281 = vpack.c.b16 %v273, %v271
        %vm290 = vcmask 523264
        %v292 = vsel %vm290, %v241, 0
        %294 = vmatprep.subr.bf16.mxu0 0
        %295 = vmatpush1.bf16.msra.mxu0 0
        %296 = vmatprep.subr.bf16.mxu0 0
        %297 = vmatpush1.bf16.msra.mxu0 0
        %298 = vmatprep.subr.bf16.mxu0 0
        %299 = vmatpush1.bf16.msra.mxu0 0
        %300 = vmatprep.subr.bf16.mxu0 0
        %301 = vmatpush1.bf16.msra.mxu0 0
        %302 = vmatprep.subr.bf16.mxu0 %v281
        %303 = vmatpush1.bf16.msra.mxu0 %v280
        %304 = vmatprep.subr.bf16.mxu0 %v279
        %305 = vmatpush1.bf16.msra.mxu0 %v278
        %306 = vmatprep.subr.bf16.mxu0 %v277
        %307 = vmatpush1.bf16.msra.mxu0 %v276
        %308 = vmatprep.subr.bf16.mxu0 %v275
        %309 = vmatpush1.bf16.msra.mxu0 %v274
        %310 = vmatprep.subr.bf16.mxu0 0
        %311 = vmatpush2.bf16.msra.mxu0 0
        %312 = vmatprep.subr.bf16.mxu0 0
        %313 = vmatpush2.bf16.msra.mxu0 0
        %314 = vmatprep.subr.bf16.mxu0 0
        %315 = vmatpush2.bf16.msra.mxu0 0
        %316 = vmatprep.subr.bf16.mxu0 0
        %317 = vmatpush2.bf16.msra.mxu0 0
        %318 = vmatprep.subr.bf16.mxu0 0
        %319 = vmatpush2.bf16.msra.mxu0 0
        %320 = vmatprep.subr.bf16.mxu0 0
        %321 = vmatpush2.bf16.msra.mxu0 0
        %322 = vmatprep.subr.bf16.mxu0 0
        %323 = vmatpush2.bf16.msra.mxu0 0
        %324 = vmatprep.subr.bf16.mxu0 0
        %325 = vmatpush2.bf16.msra.mxu0 0
        %326 = vmatprep.mubr.bf16.mxu0 0
        %327 = vmatmul.mubr.bf16.gmra.mxu0 %v292
        %v328 = vpop.f32.mrf.mxu0
        %v329 = vadd.f32 0.0, %v328
        %v330 = vpop.f32.mrf.mxu0
        %v331 = vadd.f32 0.0, %v330
        %v332 = vpop.f32.mrf.mxu0
        %v333 = vpop.f32.mrf.mxu0
        %334 = vdwg.mxu0
        %335 = vst [vmem:[%s234] sm:$0xff] %v329
        %336 = vst [vmem:[%s234 + $0x8] sm:$0xff] %v331
        %s337 = sand.u32 %s116, 1
        %s338 = scalar_lea.sflag [#allocation4], %s337
        %s339 = sand.u32 %s116, 1
        %s340 = smul.addr %s339, 16
        %s341 = scalar_lea.vmem [#allocation8], %s340
        // Predicated region
        $region45: #{tpu_custom_call.1} parent=31 // pred_check
          %p342 = pneg %p126
        $region46: #{tpu_custom_call.1} parent=31 // pred_check_branch
          %344 = sbr.rel (%p342) target = $region48
        $region47: #{tpu_custom_call.1} parent=31 // pred_region
          %s345 = smul.u32 2, %s26
          %s347 = ssub.s32 256, 256
          %348 = vsyncadd %s338, %s347
          %s349 = smul.addr %s25, 2
          %s350 = sadd.s32 %s345, %s349
          %s351 = smul.addr %s350, 128
          %s352 = scalar_lea.hbm %s3, %s351
          %s354 = sshll.u32 %s341, 4
          %s355 = int_to_ptr.vmem [resolvable:$true] %s354
          %357 = dma.vmem_to_hbm [thread:$0]  %s355, 256, %s352, %s338
        $region48: #{tpu_custom_call.1} parent=31 // pred_fallthru
          _
      $region32: #{tpu_custom_call.1} parent=5 // pred_fallthru
        _
      %p358 = scmp.le.s32.totalorder 2, %s16
      // Predicated region
      $region49: #{tpu_custom_call.1} parent=5 // pred_check
        %p359 = pneg %p358
      $region50: #{tpu_custom_call.1} parent=5 // pred_check_branch
        %361 = sbr.rel (%p359) target = $region52
      $region51: #{tpu_custom_call.1} parent=5 // pred_region
        %s362 = ssub.s32 %s16, 2
        // Predicated region
        $region53: #{tpu_custom_call.1} parent=51 // pred_check
          %p363 = pneg %p132
        $region54: #{tpu_custom_call.1} parent=51 // pred_check_branch
          %365 = sbr.rel (%p363) target = $region56
        $region55: #{tpu_custom_call.1} parent=51 // pred_region
          %s366 = sand.u32 %s117, 1
          %s367 = scalar_lea.sflag [#allocation4], %s366
          %s368 = sand.u32 %s117, 1
          %s369 = smul.addr %s368, 16
          %s370 = scalar_lea.vmem [#allocation8], %s369
          %371 = dma.done %s367, 256
        $region56: #{tpu_custom_call.1} parent=51 // pred_fallthru
          _
      $region52: #{tpu_custom_call.1} parent=5 // pred_fallthru
        _
    $region6: #{tpu_custom_call.1} parent=1 // loop_footer
      %s20 = sadd.s32 1, %s16
    $region7: #{tpu_custom_call.1} parent=1 // loop_footer_branch
      %15 = sbr.rel target = $region3
    $region8: #{tpu_custom_call.1} parent=1 // loop_exit
      _
    %372 = vsyncpa [#allocation3], 1
    %s373 = scalar_lea.sflag [#allocation3], 1
    %374 = vsyncpa %s373, 1
    %375 = vsyncpa [#allocation6], 1
    %376 = vsyncpa [#allocation4], 1
    %s377 = scalar_lea.sflag [#allocation4], 1
    %378 = vsyncpa %s377, 1

</llo_original>
